<compile_context>
chip_gen: v7x
topology: tpu7x:2x2x1
jax: 0.10.0
libtpu: 0.0.40
codegen_flags: <defaults>
</compile_context>

<pallas_src>
import jax
import jax.numpy as jnp
from jax.experimental import pallas as pl
from jax.experimental.pallas import tpu as pltpu

KH = KW = 3  # kernel size (padding=1 -> "same" output)


def conv_mm_kernel(w_ref, p_ref, o_ref):
    """Single MXU matmul for the whole batch.

    w_ref: (Cout, Kp)   conv weights + bias column (+ zero padding cols)
    p_ref: (Kp, N*HW)   im2col patches for all images + ones row (+ zero rows)
    o_ref: (Cout, N*HW) output, lane-dense (N*HW % 128 == 0)
    """
    o_ref[...] = jnp.dot(w_ref[...], p_ref[...],
                         preferred_element_type=jnp.float32)


@jax.jit
def conv2d_3x3_same(x_nchw, w_oihw, bias):
    """Mirror of MyModel.forward: Conv2d(33, 32, kernel_size=3, padding=1, bias=True)."""
    N, Cin, H, W = x_nchw.shape
    Cout = w_oihw.shape[0]
    K = KH * KW * Cin              # 297
    HW = H * W                     # 256
    NHW = N * HW                   # 512
    Kp = ((K + 1 + 7) // 8) * 8    # pad K (+1 bias row) up to a multiple of 8 -> 304
    n_zero = Kp - K - 1            # extra all-zero rows/cols (6)

    f32 = jnp.float32

    # --- wrapper glue (single fused XLA pass; everything stays in NCHW order) ---
    # im2col directly in (K, N*HW) layout, feature order (kh, kw, ci):
    #   patches[(kh*KW + kw)*Cin + ci, n*HW + h*W + w]
    x_pad = jnp.pad(x_nchw, ((0, 0), (0, 0), (1, 1), (1, 1)))
    x_pad_t = jnp.transpose(x_pad, (1, 0, 2, 3))          # (Cin, N, H+2, W+2)
    taps = [x_pad_t[:, :, kh:kh + H, kw:kw + W]
            for kh in range(KH) for kw in range(KW)]       # each (Cin, N, H, W)
    patches = jnp.concatenate(taps, axis=0).reshape(K, NHW).astype(f32)
    patches = jnp.concatenate(
        [patches,
         jnp.ones((1, NHW), dtype=f32),                    # bias row
         jnp.zeros((n_zero, NHW), dtype=f32)], axis=0)     # (Kp, N*HW)

    # Weights to (Cout, Kp) in the same (kh, kw, ci) order, bias folded in.
    w_mat = jnp.transpose(w_oihw, (0, 2, 3, 1)).reshape(Cout, K).astype(f32)
    w_mat = jnp.concatenate(
        [w_mat,
         bias.reshape(Cout, 1).astype(f32),                # bias column
         jnp.zeros((Cout, n_zero), dtype=f32)], axis=1)    # (Cout, Kp)

    bytes_accessed = 4 * (Cout * Kp + Kp * NHW + Cout * NHW)
    out_flat = pl.pallas_call(
        conv_mm_kernel,
        out_shape=jax.ShapeDtypeStruct((Cout, NHW), f32),
        grid=(1,),
        in_specs=[
            pl.BlockSpec((Cout, Kp), lambda i: (0, 0)),
            pl.BlockSpec((Kp, NHW), lambda i: (0, 0)),
        ],
        out_specs=pl.BlockSpec((Cout, NHW), lambda i: (0, 0)),
        cost_estimate=pl.CostEstimate(
            flops=2 * Cout * Kp * NHW,
            bytes_accessed=bytes_accessed,
            transcendentals=0),
        compiler_params=pltpu.CompilerParams(
            dimension_semantics=("arbitrary",)),
    )(w_mat, patches)

    # (Cout, N*HW) -> (N, Cout, H, W): one cheap transpose on the 64 KB result.
    return jnp.transpose(out_flat.reshape(Cout, N, H, W), (1, 0, 2, 3))


if __name__ == "__main__":
    key = jax.random.PRNGKey(0)
    k_x, k_w, k_b = jax.random.split(key, 3)

    N, Cin, H, W = 2, 33, 16, 16
    Cout = 32

    # Deterministic parameter init (shapes match nn.Conv2d(33, 32, 3, padding=1)).
    x = jax.random.normal(k_x, (N, Cin, H, W), dtype=jnp.float32)
    w = jax.random.normal(k_w, (Cout, Cin, KH, KW), dtype=jnp.float32) * 0.05
    b = jax.random.normal(k_b, (Cout,), dtype=jnp.float32) * 0.1

    out = jax.block_until_ready(conv2d_3x3_same(x, w, b))

    # Reference check against XLA's conv (same semantics as torch Conv2d).
    ref = jax.lax.conv_general_dilated(
        x, w, window_strides=(1, 1), padding=((1, 1), (1, 1)),
        dimension_numbers=("NCHW", "OIHW", "NCHW"))
    ref = ref + b.reshape(1, Cout, 1, 1)
    assert out.shape == (N, Cout, H, W)
    assert jnp.allclose(out, ref, atol=2e-4, rtol=2e-4)

    print("KERNEL_OK")
</pallas_src>

<mosaic_0001>
module attributes {stable_mosaic.version = 11 : i64} {
  func.func @conv_mm_kernel(%arg0: i32, %arg1: memref<32x304xf32, #tpu.memory_space<vmem>>, %arg2: memref<304x512xf32, #tpu.memory_space<vmem>>, %arg3: memref<32x512xf32, #tpu.memory_space<vmem>>) attributes {dimension_semantics = [#tpu.dimension_semantics<arbitrary>], iteration_bounds = array<i64: 1>, scalar_prefetch = 0 : i64, scratch_operands = 0 : i64, tpu.core_type = #tpu.core_type<tc>, window_params = [{pipeline_mode = #tpu.pipeline_mode<synchronous>, transform_indices = @transform_0, window_bounds = array<i64: 32, 304>}, {pipeline_mode = #tpu.pipeline_mode<synchronous>, transform_indices = @transform_1, window_bounds = array<i64: 304, 512>}, {pipeline_mode = #tpu.pipeline_mode<synchronous>, transform_indices = @transform_2, window_bounds = array<i64: 32, 512>}]} {
    %c0 = arith.constant 0 : index
    %c0_0 = arith.constant 0 : index
    %0 = vector.load %arg1[%c0, %c0_0] : memref<32x304xf32, #tpu.memory_space<vmem>>, vector<32x304xf32>
    %c0_1 = arith.constant 0 : index
    %c0_2 = arith.constant 0 : index
    %1 = vector.load %arg2[%c0_1, %c0_2] : memref<304x512xf32, #tpu.memory_space<vmem>>, vector<304x512xf32>
    %cst = arith.constant dense<0.000000e+00> : vector<32x512xf32>
    %2 = tpu.matmul %0, %1, %cst {dimension_numbers = #tpu.dot_dimension_numbers<[1], [0], [0], [1], [0, 0, 1, 1], [], []>} : vector<32x304xf32>, vector<304x512xf32>, vector<32x512xf32> -> vector<32x512xf32>
    %c0_3 = arith.constant 0 : index
    %c0_4 = arith.constant 0 : index
    %3 = vector.load %arg3[%c0_3, %c0_4] : memref<32x512xf32, #tpu.memory_space<vmem>>, vector<32x512xf32>
    tpu.vector_store %arg3[%c0_3, %c0_4], %2 {strides = array<i32>} : memref<32x512xf32, #tpu.memory_space<vmem>>, vector<32x512xf32>,
    return
  }
  func.func @transform_0(%arg0: i32) -> (i32, i32) {
    %c0_i32 = arith.constant 0 : i32
    %c0_i32_0 = arith.constant 0 : i32
    %c0_i32_1 = arith.constant 0 : i32
    return %c0_i32, %c0_i32_0 : i32, i32
  }
  func.func @transform_1(%arg0: i32) -> (i32, i32) {
    %c0_i32 = arith.constant 0 : i32
    %c0_i32_0 = arith.constant 0 : i32
    %c0_i32_1 = arith.constant 0 : i32
    return %c0_i32, %c0_i32_0 : i32, i32
  }
  func.func @transform_2(%arg0: i32) -> (i32, i32) {
    %c0_i32 = arith.constant 0 : i32
    %c0_i32_0 = arith.constant 0 : i32
    %c0_i32_1 = arith.constant 0 : i32
    return %c0_i32, %c0_i32_0 : i32, i32
  }
}

</mosaic_0001>

<llo_original>
// kernel: conv2d_3x3_same.1
$region0: #{conv2d_3x3_same.1}
  #allocation0 [shape = 'u32[]', space=smem, size = 0x4, offset = 0x4, fixed_abs, tag = 'smem constant byte address 0x4 - core index']
  #allocation1 [shape = 'u32[144,128]{1,0:T(1,128)}', space=vmem, size = 0x12000, scoped, tag = 'internal scratch']
  %s0 = inlined_call_operand.vmem [shape: f32[32,304], index: 0, kind: input, shape index: {}]
  %s1 = inlined_call_operand.vmem [shape: f32[304,512], index: 1, kind: input, shape index: {}]
  %s2 = inlined_call_operand.vmem [shape: f32[32,512], index: 2, kind: output, shape index: {}]
  %s3 = sld [smem:[#allocation0]]
  $region18: #{conv2d_3x3_same.1} parent=0
    _
  %s5 = ssub.s32 1, %s3
  %s6 = scalar_select 0, %s5, %s3
  // Predicated region
  $region2: #{conv2d_3x3_same.1} parent=0 // pred_check
    _
  $region3: #{conv2d_3x3_same.1} parent=0 // pred_check_branch
    %8 = sbr.rel (0) target = $region5
  $region4: #{conv2d_3x3_same.1} parent=0 // pred_region
    _
  $region5: #{conv2d_3x3_same.1} parent=0 // pred_fallthru
    _
  // Predicated region
  $region6: #{conv2d_3x3_same.1} parent=0 // pred_check
    _
  $region7: #{conv2d_3x3_same.1} parent=0 // pred_check_branch
    %10 = sbr.rel (0) target = $region9
  $region8: #{conv2d_3x3_same.1} parent=0 // pred_region
    _
  $region9: #{conv2d_3x3_same.1} parent=0 // pred_fallthru
    _
  %v11 = vld [vmem:[%s0] sm:$0xff]
  %v12 = vld [vmem:[%s0 + $0x8] sm:$0xff]
  %v13 = vld [vmem:[%s0 + $0x10] sm:$0xff]
  %v14 = vld [vmem:[%s0 + $0x18] sm:$0xff]
  %v15 = vld [vmem:[%s0 + $0x20] sm:$0xff]
  %v16 = vld [vmem:[%s0 + $0x28] sm:$0xff]
  %v17 = vld [vmem:[%s0 + $0x30] sm:$0xff]
  %v18 = vld [vmem:[%s0 + $0x38] sm:$0xff]
  %v19 = vld [vmem:[%s0 + $0x40] sm:$0xff]
  %v20 = vld [vmem:[%s0 + $0x48] sm:$0xff]
  %v21 = vld [vmem:[%s0 + $0x50] sm:$0xff]
  %v22 = vld [vmem:[%s0 + $0x58] sm:$0xff]
  %v23 = vld [vmem:[%s1] sm:$0xff]
  %v24 = vld [vmem:[%s1 + $0x8] sm:$0xff]
  %v25 = vld [vmem:[%s1 + $0x10] sm:$0xff]
  %v26 = vld [vmem:[%s1 + $0x18] sm:$0xff]
  %v27 = vld [vmem:[%s1 + $0x20] sm:$0xff]
  %v28 = vld [vmem:[%s1 + $0x28] sm:$0xff]
  %v29 = vld [vmem:[%s1 + $0x30] sm:$0xff]
  %v30 = vld [vmem:[%s1 + $0x38] sm:$0xff]
  %v31 = vld [vmem:[%s1 + $0x40] sm:$0xff]
  %v32 = vld [vmem:[%s1 + $0x48] sm:$0xff]
  %v33 = vld [vmem:[%s1 + $0x50] sm:$0xff]
  %v34 = vld [vmem:[%s1 + $0x58] sm:$0xff]
  %v35 = vld [vmem:[%s1 + $0x60] sm:$0xff]
  %v36 = vld [vmem:[%s1 + $0x68] sm:$0xff]
  %v37 = vld [vmem:[%s1 + $0x70] sm:$0xff]
  %v38 = vld [vmem:[%s1 + $0x78] sm:$0xff]
  %v39 = vld [vmem:[%s1 + $0x80] sm:$0xff]
  %v40 = vld [vmem:[%s1 + $0x88] sm:$0xff]
  %v41 = vld [vmem:[%s1 + $0x90] sm:$0xff]
  %v42 = vld [vmem:[%s1 + $0x98] sm:$0xff]
  %v43 = vld [vmem:[%s1 + $0xa0] sm:$0xff]
  %v44 = vld [vmem:[%s1 + $0xa8] sm:$0xff]
  %v45 = vld [vmem:[%s1 + $0xb0] sm:$0xff]
  %v46 = vld [vmem:[%s1 + $0xb8] sm:$0xff]
  %v47 = vld [vmem:[%s1 + $0xc0] sm:$0xff]
  %v48 = vld [vmem:[%s1 + $0xc8] sm:$0xff]
  %v49 = vld [vmem:[%s1 + $0xd0] sm:$0xff]
  %v50 = vld [vmem:[%s1 + $0xd8] sm:$0xff]
  %v51 = vld [vmem:[%s1 + $0xe0] sm:$0xff]
  %v52 = vld [vmem:[%s1 + $0xe8] sm:$0xff]
  %v53 = vld [vmem:[%s1 + $0xf0] sm:$0xff]
  %v54 = vld [vmem:[%s1 + $0xf8] sm:$0xff]
  %v55 = vld [vmem:[%s1 + $0x100] sm:$0xff]
  %v56 = vld [vmem:[%s1 + $0x108] sm:$0xff]
  %v57 = vld [vmem:[%s1 + $0x110] sm:$0xff]
  %v58 = vld [vmem:[%s1 + $0x118] sm:$0xff]
  %v59 = vld [vmem:[%s1 + $0x120] sm:$0xff]
  %v60 = vld [vmem:[%s1 + $0x128] sm:$0xff]
  %v61 = vld [vmem:[%s1 + $0x130] sm:$0xff]
  %v62 = vld [vmem:[%s1 + $0x138] sm:$0xff]
  %v63 = vld [vmem:[%s1 + $0x140] sm:$0xff]
  %v64 = vld [vmem:[%s1 + $0x148] sm:$0xff]
  %v65 = vld [vmem:[%s1 + $0x150] sm:$0xff]
  %v66 = vld [vmem:[%s1 + $0x158] sm:$0xff]
  %v67 = vld [vmem:[%s1 + $0x160] sm:$0xff]
  %v68 = vld [vmem:[%s1 + $0x168] sm:$0xff]
  %v69 = vld [vmem:[%s1 + $0x170] sm:$0xff]
  %v70 = vld [vmem:[%s1 + $0x178] sm:$0xff]
  %v71 = vld [vmem:[%s1 + $0x180] sm:$0xff]
  %v72 = vld [vmem:[%s1 + $0x188] sm:$0xff]
  %v73 = vld [vmem:[%s1 + $0x190] sm:$0xff]
  %v74 = vld [vmem:[%s1 + $0x198] sm:$0xff]
  %v75 = vld [vmem:[%s1 + $0x1a0] sm:$0xff]
  %v76 = vld [vmem:[%s1 + $0x1a8] sm:$0xff]
  %v77 = vld [vmem:[%s1 + $0x1b0] sm:$0xff]
  %v78 = vld [vmem:[%s1 + $0x1b8] sm:$0xff]
  %v79 = vld [vmem:[%s1 + $0x1c0] sm:$0xff]
  %v80 = vld [vmem:[%s1 + $0x1c8] sm:$0xff]
  %v81 = vld [vmem:[%s1 + $0x1d0] sm:$0xff]
  %v82 = vld [vmem:[%s1 + $0x1d8] sm:$0xff]
  %v83 = vld [vmem:[%s1 + $0x1e0] sm:$0xff]
  %v84 = vld [vmem:[%s1 + $0x1e8] sm:$0xff]
  %v85 = vld [vmem:[%s1 + $0x1f0] sm:$0xff]
  %v86 = vld [vmem:[%s1 + $0x1f8] sm:$0xff]
  %v87 = vld [vmem:[%s1 + $0x200] sm:$0xff]
  %v88 = vld [vmem:[%s1 + $0x208] sm:$0xff]
  %v89 = vld [vmem:[%s1 + $0x210] sm:$0xff]
  %v90 = vld [vmem:[%s1 + $0x218] sm:$0xff]
  %v91 = vld [vmem:[%s1 + $0x220] sm:$0xff]
  %v92 = vld [vmem:[%s1 + $0x228] sm:$0xff]
  %v93 = vld [vmem:[%s1 + $0x230] sm:$0xff]
  %v94 = vld [vmem:[%s1 + $0x238] sm:$0xff]
  %v95 = vld [vmem:[%s1 + $0x240] sm:$0xff]
  %v96 = vld [vmem:[%s1 + $0x248] sm:$0xff]
  %v97 = vld [vmem:[%s1 + $0x250] sm:$0xff]
  %v98 = vld [vmem:[%s1 + $0x258] sm:$0xff]
  %v99 = vld [vmem:[%s1 + $0x260] sm:$0xff]
  %v100 = vld [vmem:[%s1 + $0x268] sm:$0xff]
  %v101 = vld [vmem:[%s1 + $0x270] sm:$0xff]
  %v102 = vld [vmem:[%s1 + $0x278] sm:$0xff]
  %v103 = vld [vmem:[%s1 + $0x280] sm:$0xff]
  %v104 = vld [vmem:[%s1 + $0x288] sm:$0xff]
  %v105 = vld [vmem:[%s1 + $0x290] sm:$0xff]
  %v106 = vld [vmem:[%s1 + $0x298] sm:$0xff]
  %v107 = vld [vmem:[%s1 + $0x2a0] sm:$0xff]
  %v108 = vld [vmem:[%s1 + $0x2a8] sm:$0xff]
  %v109 = vld [vmem:[%s1 + $0x2b0] sm:$0xff]
  %v110 = vld [vmem:[%s1 + $0x2b8] sm:$0xff]
  %v111 = vld [vmem:[%s1 + $0x2c0] sm:$0xff]
  %v112 = vld [vmem:[%s1 + $0x2c8] sm:$0xff]
  %v113 = vld [vmem:[%s1 + $0x2d0] sm:$0xff]
  %v114 = vld [vmem:[%s1 + $0x2d8] sm:$0xff]
  %v115 = vld [vmem:[%s1 + $0x2e0] sm:$0xff]
  %v116 = vld [vmem:[%s1 + $0x2e8] sm:$0xff]
  %v117 = vld [vmem:[%s1 + $0x2f0] sm:$0xff]
  %v118 = vld [vmem:[%s1 + $0x2f8] sm:$0xff]
  %v119 = vld [vmem:[%s1 + $0x300] sm:$0xff]
  %v120 = vld [vmem:[%s1 + $0x308] sm:$0xff]
  %v121 = vld [vmem:[%s1 + $0x310] sm:$0xff]
  %v122 = vld [vmem:[%s1 + $0x318] sm:$0xff]
  %v123 = vld [vmem:[%s1 + $0x320] sm:$0xff]
  %v124 = vld [vmem:[%s1 + $0x328] sm:$0xff]
  %v125 = vld [vmem:[%s1 + $0x330] sm:$0xff]
  %v126 = vld [vmem:[%s1 + $0x338] sm:$0xff]
  %v127 = vld [vmem:[%s1 + $0x340] sm:$0xff]
  %v128 = vld [vmem:[%s1 + $0x348] sm:$0xff]
  %v129 = vld [vmem:[%s1 + $0x350] sm:$0xff]
  %v130 = vld [vmem:[%s1 + $0x358] sm:$0xff]
  %v131 = vld [vmem:[%s1 + $0x360] sm:$0xff]
  %v132 = vld [vmem:[%s1 + $0x368] sm:$0xff]
  %v133 = vld [vmem:[%s1 + $0x370] sm:$0xff]
  %v134 = vld [vmem:[%s1 + $0x378] sm:$0xff]
  %v135 = vld [vmem:[%s1 + $0x380] sm:$0xff]
  %v136 = vld [vmem:[%s1 + $0x388] sm:$0xff]
  %v137 = vld [vmem:[%s1 + $0x390] sm:$0xff]
  %v138 = vld [vmem:[%s1 + $0x398] sm:$0xff]
  %v139 = vld [vmem:[%s1 + $0x3a0] sm:$0xff]
  %v140 = vld [vmem:[%s1 + $0x3a8] sm:$0xff]
  %v141 = vld [vmem:[%s1 + $0x3b0] sm:$0xff]
  %v142 = vld [vmem:[%s1 + $0x3b8] sm:$0xff]
  %v143 = vld [vmem:[%s1 + $0x3c0] sm:$0xff]
  %v144 = vld [vmem:[%s1 + $0x3c8] sm:$0xff]
  %v145 = vld [vmem:[%s1 + $0x3d0] sm:$0xff]
  %v146 = vld [vmem:[%s1 + $0x3d8] sm:$0xff]
  %v147 = vld [vmem:[%s1 + $0x3e0] sm:$0xff]
  %v148 = vld [vmem:[%s1 + $0x3e8] sm:$0xff]
  %v149 = vld [vmem:[%s1 + $0x3f0] sm:$0xff]
  %v150 = vld [vmem:[%s1 + $0x3f8] sm:$0xff]
  %v151 = vld [vmem:[%s1 + $0x400] sm:$0xff]
  %v152 = vld [vmem:[%s1 + $0x408] sm:$0xff]
  %v153 = vld [vmem:[%s1 + $0x410] sm:$0xff]
  %v154 = vld [vmem:[%s1 + $0x418] sm:$0xff]
  %v155 = vld [vmem:[%s1 + $0x420] sm:$0xff]
  %v156 = vld [vmem:[%s1 + $0x428] sm:$0xff]
  %v157 = vld [vmem:[%s1 + $0x430] sm:$0xff]
  %v158 = vld [vmem:[%s1 + $0x438] sm:$0xff]
  %v159 = vld [vmem:[%s1 + $0x440] sm:$0xff]
  %v160 = vld [vmem:[%s1 + $0x448] sm:$0xff]
  %v161 = vld [vmem:[%s1 + $0x450] sm:$0xff]
  %v162 = vld [vmem:[%s1 + $0x458] sm:$0xff]
  %v163 = vld [vmem:[%s1 + $0x460] sm:$0xff]
  %v164 = vld [vmem:[%s1 + $0x468] sm:$0xff]
  %v165 = vld [vmem:[%s1 + $0x470] sm:$0xff]
  %v166 = vld [vmem:[%s1 + $0x478] sm:$0xff]
  %v167 = vld [vmem:[%s1 + $0x480] sm:$0xff]
  %v168 = vld [vmem:[%s1 + $0x488] sm:$0xff]
  %v169 = vld [vmem:[%s1 + $0x490] sm:$0xff]
  %v170 = vld [vmem:[%s1 + $0x498] sm:$0xff]
  %v171 = vld [vmem:[%s1 + $0x4a0] sm:$0xff]
  %v172 = vld [vmem:[%s1 + $0x4a8] sm:$0xff]
  %v173 = vld [vmem:[%s1 + $0x4b0] sm:$0xff]
  %v174 = vld [vmem:[%s1 + $0x4b8] sm:$0xff]
  %vm175 = vcmask 392192
  %v177 = vsel %vm175, %v13, 0
  %v180 = vsel %vm175, %v16, 0
  %v183 = vsel %vm175, %v19, 0
  %v186 = vsel %vm175, %v22, 0
  %188 = vmatprep.subr.mxu0 %v24
  %189 = vmatpush1.msra.mxu0 %v23
  %190 = vmatprep.subr.mxu0 %v28
  %191 = vmatpush1.msra.mxu0 %v27
  %192 = vmatprep.subr.mxu0 %v32
  %193 = vmatpush1.msra.mxu0 %v31
  %194 = vmatprep.subr.mxu0 %v36
  %195 = vmatpush1.msra.mxu0 %v35
  %196 = vmatprep.subr.mxu0 %v40
  %197 = vmatpush1.msra.mxu0 %v39
  %198 = vmatprep.subr.mxu0 %v44
  %199 = vmatpush1.msra.mxu0 %v43
  %200 = vmatprep.subr.mxu0 %v48
  %201 = vmatpush1.msra.mxu0 %v47
  %202 = vmatprep.subr.mxu0 %v52
  %203 = vmatpush1.msra.mxu0 %v51
  %204 = vmatprep.subr.mxu0 %v56
  %205 = vmatpush1.msra.mxu0 %v55
  %206 = vmatprep.subr.mxu0 %v60
  %207 = vmatpush1.msra.mxu0 %v59
  %208 = vmatprep.subr.mxu0 %v64
  %209 = vmatpush1.msra.mxu0 %v63
  %210 = vmatprep.subr.mxu0 %v68
  %211 = vmatpush1.msra.mxu0 %v67
  %212 = vmatprep.subr.mxu0 %v72
  %213 = vmatpush1.msra.mxu0 %v71
  %214 = vmatprep.subr.mxu0 %v76
  %215 = vmatpush1.msra.mxu0 %v75
  %216 = vmatprep.subr.mxu0 %v80
  %217 = vmatpush1.msra.mxu0 %v79
  %218 = vmatprep.subr.mxu0 %v84
  %219 = vmatpush1.msra.mxu0 %v83
  %220 = vmatprep.subr.mxu0 %v88
  %221 = vmatpush1.msra.mxu0 %v87
  %222 = vmatprep.subr.mxu0 %v92
  %223 = vmatpush1.msra.mxu0 %v91
  %224 = vmatprep.subr.mxu0 %v96
  %225 = vmatpush1.msra.mxu0 %v95
  %226 = vmatprep.subr.mxu0 %v100
  %227 = vmatpush1.msra.mxu0 %v99
  %228 = vmatprep.subr.mxu0 %v104
  %229 = vmatpush1.msra.mxu0 %v103
  %230 = vmatprep.subr.mxu0 %v108
  %231 = vmatpush1.msra.mxu0 %v107
  %232 = vmatprep.subr.mxu0 %v112
  %233 = vmatpush1.msra.mxu0 %v111
  %234 = vmatprep.subr.mxu0 %v116
  %235 = vmatpush1.msra.mxu0 %v115
  %236 = vmatprep.subr.mxu0 %v120
  %237 = vmatpush1.msra.mxu0 %v119
  %238 = vmatprep.subr.mxu0 %v124
  %239 = vmatpush1.msra.mxu0 %v123
  %240 = vmatprep.subr.mxu0 %v128
  %241 = vmatpush1.msra.mxu0 %v127
  %242 = vmatprep.subr.mxu0 %v132
  %243 = vmatpush1.msra.mxu0 %v131
  %244 = vmatprep.subr.mxu0 %v136
  %245 = vmatpush1.msra.mxu0 %v135
  %246 = vmatprep.subr.mxu0 %v140
  %247 = vmatpush1.msra.mxu0 %v139
  %248 = vmatprep.subr.mxu0 %v144
  %249 = vmatpush1.msra.mxu0 %v143
  %250 = vmatprep.subr.mxu0 %v148
  %251 = vmatpush1.msra.mxu0 %v147
  %252 = vmatprep.mubr.f32.mxu0 %v12
  %253 = vmatmul.mubr.f32.gmra.mrb[0].mxu0 %v11
  %v254 = vpop.f32.mrb[0].mxu0
  %v255 = vadd.f32 0.0, %v254
  %v256 = vpop.f32.mrb[0].mxu0
  %v257 = vadd.f32 0.0, %v256
  %258 = vmatprep.mubr.f32.mxu0 %v15
  %259 = vmatmul.mubr.f32.gmra.mrb[0].mxu0 %v14
  %v260 = vpop.f32.mrb[0].mxu0
  %v261 = vadd.f32 0.0, %v260
  %v262 = vpop.f32.mrb[0].mxu0
  %v263 = vadd.f32 0.0, %v262
  %264 = vmatprep.mubr.f32.mxu0 %v18
  %265 = vmatmul.mubr.f32.gmra.mrb[0].mxu0 %v17
  %v266 = vpop.f32.mrb[0].mxu0
  %v267 = vadd.f32 0.0, %v266
  %v268 = vpop.f32.mrb[0].mxu0
  %v269 = vadd.f32 0.0, %v268
  %270 = vmatprep.mubr.f32.mxu0 %v21
  %271 = vmatmul.mubr.f32.gmra.mrb[0].mxu0 %v20
  %v272 = vpop.f32.mrb[0].mxu0
  %v273 = vadd.f32 0.0, %v272
  %v274 = vpop.f32.mrb[0].mxu0
  %v275 = vadd.f32 0.0, %v274
  %276 = vdwg.mxu0
  %277 = vmatprep.subr.mxu0 %v152
  %278 = vmatpush1.msra.mxu0 %v151
  %279 = vmatprep.subr.mxu0 %v156
  %280 = vmatpush1.msra.mxu0 %v155
  %281 = vmatprep.subr.mxu0 %v160
  %282 = vmatpush1.msra.mxu0 %v159
  %283 = vmatprep.subr.mxu0 %v164
  %284 = vmatpush1.msra.mxu0 %v163
  %285 = vmatprep.subr.mxu0 %v168
  %286 = vmatpush1.msra.mxu0 %v167
  %287 = vmatprep.subr.mxu0 %v172
  %288 = vmatpush1.msra.mxu0 %v171
  %289 = vmatprep.subr.mxu0 0.0
  %290 = vmatpush1.msra.mxu0 0.0
  %291 = vmatprep.subr.mxu0 0.0
  %292 = vmatpush1.msra.mxu0 0.0
  %293 = vmatprep.subr.mxu0 0.0
  %294 = vmatpush1.msra.mxu0 0.0
  %295 = vmatprep.subr.mxu0 0.0
  %296 = vmatpush1.msra.mxu0 0.0
  %297 = vmatprep.subr.mxu0 0.0
  %298 = vmatpush1.msra.mxu0 0.0
  %299 = vmatprep.subr.mxu0 0.0
  %300 = vmatpush1.msra.mxu0 0.0
  %301 = vmatprep.subr.mxu0 0.0
  %302 = vmatpush1.msra.mxu0 0.0
  %303 = vmatprep.subr.mxu0 0.0
  %304 = vmatpush1.msra.mxu0 0.0
  %305 = vmatprep.subr.mxu0 0.0
  %306 = vmatpush1.msra.mxu0 0.0
  %307 = vmatprep.subr.mxu0 0.0
  %308 = vmatpush1.msra.mxu0 0.0
  %309 = vmatprep.subr.mxu0 0.0
  %310 = vmatpush1.msra.mxu0 0.0
  %311 = vmatprep.subr.mxu0 0.0
  %312 = vmatpush1.msra.mxu0 0.0
  %313 = vmatprep.subr.mxu0 0.0
  %314 = vmatpush1.msra.mxu0 0.0
  %315 = vmatprep.subr.mxu0 0.0
  %316 = vmatpush1.msra.mxu0 0.0
  %317 = vmatprep.subr.mxu0 0.0
  %318 = vmatpush1.msra.mxu0 0.0
  %319 = vmatprep.subr.mxu0 0.0
  %320 = vmatpush1.msra.mxu0 0.0
  %321 = vmatprep.subr.mxu0 0.0
  %322 = vmatpush1.msra.mxu0 0.0
  %323 = vmatprep.subr.mxu0 0.0
  %324 = vmatpush1.msra.mxu0 0.0
  %325 = vmatprep.subr.mxu0 0.0
  %326 = vmatpush1.msra.mxu0 0.0
  %327 = vmatprep.subr.mxu0 0.0
  %328 = vmatpush1.msra.mxu0 0.0
  %329 = vmatprep.subr.mxu0 0.0
  %330 = vmatpush1.msra.mxu0 0.0
  %331 = vmatprep.subr.mxu0 0.0
  %332 = vmatpush1.msra.mxu0 0.0
  %333 = vmatprep.subr.mxu0 0.0
  %334 = vmatpush1.msra.mxu0 0.0
  %335 = vmatprep.subr.mxu0 0.0
  %336 = vmatpush1.msra.mxu0 0.0
  %337 = vmatprep.subr.mxu0 0.0
  %338 = vmatpush1.msra.mxu0 0.0
  %339 = vmatprep.subr.mxu0 0.0
  %340 = vmatpush1.msra.mxu0 0.0
  %341 = vmatprep.mubr.f32.mxu0 0.0
  %342 = vmatmul.mubr.f32.gmra.mrb[0].mxu0 %v177
  %v343 = vpop.f32.mrb[0].mxu0
  %v344 = vadd.f32 %v255, %v343
  %v345 = vpop.f32.mrb[0].mxu0
  %v346 = vadd.f32 %v257, %v345
  %347 = vmatprep.mubr.f32.mxu0 0.0
  %348 = vmatmul.mubr.f32.gmra.mrb[0].mxu0 %v180
  %v349 = vpop.f32.mrb[0].mxu0
  %v350 = vadd.f32 %v261, %v349
  %v351 = vpop.f32.mrb[0].mxu0
  %v352 = vadd.f32 %v263, %v351
  %353 = vmatprep.mubr.f32.mxu0 0.0
  %354 = vmatmul.mubr.f32.gmra.mrb[0].mxu0 %v183
  %v355 = vpop.f32.mrb[0].mxu0
  %v356 = vadd.f32 %v267, %v355
  %v357 = vpop.f32.mrb[0].mxu0
  %v358 = vadd.f32 %v269, %v357
  %359 = vmatprep.mubr.f32.mxu0 0.0
  %360 = vmatmul.mubr.f32.gmra.mrb[0].mxu0 %v186
  %v361 = vpop.f32.mrb[0].mxu0
  %v362 = vadd.f32 %v273, %v361
  %v363 = vpop.f32.mrb[0].mxu0
  %v364 = vadd.f32 %v275, %v363
  %365 = vdwg.mxu0
  %366 = vmatprep.subr.mxu0 %v26
  %367 = vmatpush1.msra.mxu0 %v25
  %368 = vmatprep.subr.mxu0 %v30
  %369 = vmatpush1.msra.mxu0 %v29
  %370 = vmatprep.subr.mxu0 %v34
  %371 = vmatpush1.msra.mxu0 %v33
  %372 = vmatprep.subr.mxu0 %v38
  %373 = vmatpush1.msra.mxu0 %v37
  %374 = vmatprep.subr.mxu0 %v42
  %375 = vmatpush1.msra.mxu0 %v41
  %376 = vmatprep.subr.mxu0 %v46
  %377 = vmatpush1.msra.mxu0 %v45
  %378 = vmatprep.subr.mxu0 %v50
  %379 = vmatpush1.msra.mxu0 %v49
  %380 = vmatprep.subr.mxu0 %v54
  %381 = vmatpush1.msra.mxu0 %v53
  %382 = vmatprep.subr.mxu0 %v58
  %383 = vmatpush1.msra.mxu0 %v57
  %384 = vmatprep.subr.mxu0 %v62
  %385 = vmatpush1.msra.mxu0 %v61
  %386 = vmatprep.subr.mxu0 %v66
  %387 = vmatpush1.msra.mxu0 %v65
  %388 = vmatprep.subr.mxu0 %v70
  %389 = vmatpush1.msra.mxu0 %v69
  %390 = vmatprep.subr.mxu0 %v74
  %391 = vmatpush1.msra.mxu0 %v73
  %392 = vmatprep.subr.mxu0 %v78
  %393 = vmatpush1.msra.mxu0 %v77
  %394 = vmatprep.subr.mxu0 %v82
  %395 = vmatpush1.msra.mxu0 %v81
  %396 = vmatprep.subr.mxu0 %v86
  %397 = vmatpush1.msra.mxu0 %v85
  %398 = vmatprep.subr.mxu0 %v90
  %399 = vmatpush1.msra.mxu0 %v89
  %400 = vmatprep.subr.mxu0 %v94
  %401 = vmatpush1.msra.mxu0 %v93
  %402 = vmatprep.subr.mxu0 %v98
  %403 = vmatpush1.msra.mxu0 %v97
  %404 = vmatprep.subr.mxu0 %v102
  %405 = vmatpush1.msra.mxu0 %v101
  %406 = vmatprep.subr.mxu0 %v106
  %407 = vmatpush1.msra.mxu0 %v105
  %408 = vmatprep.subr.mxu0 %v110
  %409 = vmatpush1.msra.mxu0 %v109
  %410 = vmatprep.subr.mxu0 %v114
  %411 = vmatpush1.msra.mxu0 %v113
  %412 = vmatprep.subr.mxu0 %v118
  %413 = vmatpush1.msra.mxu0 %v117
  %414 = vmatprep.subr.mxu0 %v122
  %415 = vmatpush1.msra.mxu0 %v121
  %416 = vmatprep.subr.mxu0 %v126
  %417 = vmatpush1.msra.mxu0 %v125
  %418 = vmatprep.subr.mxu0 %v130
  %419 = vmatpush1.msra.mxu0 %v129
  %420 = vmatprep.subr.mxu0 %v134
  %421 = vmatpush1.msra.mxu0 %v133
  %422 = vmatprep.subr.mxu0 %v138
  %423 = vmatpush1.msra.mxu0 %v137
  %424 = vmatprep.subr.mxu0 %v142
  %425 = vmatpush1.msra.mxu0 %v141
  %426 = vmatprep.subr.mxu0 %v146
  %427 = vmatpush1.msra.mxu0 %v145
  %428 = vmatprep.subr.mxu0 %v150
  %429 = vmatpush1.msra.mxu0 %v149
  %430 = vmatprep.mubr.f32.mxu0 %v12
  %431 = vmatmul.mubr.f32.gmra.mrb[0].mxu0 %v11
  %v432 = vpop.f32.mrb[0].mxu0
  %v433 = vadd.f32 0.0, %v432
  %v434 = vpop.f32.mrb[0].mxu0
  %v435 = vadd.f32 0.0, %v434
  %436 = vmatprep.mubr.f32.mxu0 %v15
  %437 = vmatmul.mubr.f32.gmra.mrb[0].mxu0 %v14
  %v438 = vpop.f32.mrb[0].mxu0
  %v439 = vadd.f32 0.0, %v438
  %v440 = vpop.f32.mrb[0].mxu0
  %v441 = vadd.f32 0.0, %v440
  %442 = vmatprep.mubr.f32.mxu0 %v18
  %443 = vmatmul.mubr.f32.gmra.mrb[0].mxu0 %v17
  %v444 = vpop.f32.mrb[0].mxu0
  %v445 = vadd.f32 0.0, %v444
  %v446 = vpop.f32.mrb[0].mxu0
  %v447 = vadd.f32 0.0, %v446
  %448 = vmatprep.mubr.f32.mxu0 %v21
  %449 = vmatmul.mubr.f32.gmra.mrb[0].mxu0 %v20
  %v450 = vpop.f32.mrb[0].mxu0
  %v451 = vadd.f32 0.0, %v450
  %v452 = vpop.f32.mrb[0].mxu0
  %v453 = vadd.f32 0.0, %v452
  %454 = vdwg.mxu0
  %455 = vmatprep.subr.mxu0 %v154
  %456 = vmatpush1.msra.mxu0 %v153
  %457 = vmatprep.subr.mxu0 %v158
  %458 = vmatpush1.msra.mxu0 %v157
  %459 = vmatprep.subr.mxu0 %v162
  %460 = vmatpush1.msra.mxu0 %v161
  %461 = vmatprep.subr.mxu0 %v166
  %462 = vmatpush1.msra.mxu0 %v165
  %463 = vmatprep.subr.mxu0 %v170
  %464 = vmatpush1.msra.mxu0 %v169
  %465 = vmatprep.subr.mxu0 %v174
  %466 = vmatpush1.msra.mxu0 %v173
  %467 = vmatprep.subr.mxu0 0.0
  %468 = vmatpush1.msra.mxu0 0.0
  %469 = vmatprep.subr.mxu0 0.0
  %470 = vmatpush1.msra.mxu0 0.0
  %471 = vmatprep.subr.mxu0 0.0
  %472 = vmatpush1.msra.mxu0 0.0
  %473 = vmatprep.subr.mxu0 0.0
  %474 = vmatpush1.msra.mxu0 0.0
  %475 = vmatprep.subr.mxu0 0.0
  %476 = vmatpush1.msra.mxu0 0.0
  %477 = vmatprep.subr.mxu0 0.0
  %478 = vmatpush1.msra.mxu0 0.0
  %479 = vmatprep.subr.mxu0 0.0
  %480 = vmatpush1.msra.mxu0 0.0
  %481 = vmatprep.subr.mxu0 0.0
  %482 = vmatpush1.msra.mxu0 0.0
  %483 = vmatprep.subr.mxu0 0.0
  %484 = vmatpush1.msra.mxu0 0.0
  %485 = vmatprep.subr.mxu0 0.0
  %486 = vmatpush1.msra.mxu0 0.0
  %487 = vmatprep.subr.mxu0 0.0
  %488 = vmatpush1.msra.mxu0 0.0
  %489 = vmatprep.subr.mxu0 0.0
  %490 = vmatpush1.msra.mxu0 0.0
  %491 = vmatprep.subr.mxu0 0.0
  %492 = vmatpush1.msra.mxu0 0.0
  %493 = vmatprep.subr.mxu0 0.0
  %494 = vmatpush1.msra.mxu0 0.0
  %495 = vmatprep.subr.mxu0 0.0
  %496 = vmatpush1.msra.mxu0 0.0
  %497 = vmatprep.subr.mxu0 0.0
  %498 = vmatpush1.msra.mxu0 0.0
  %499 = vmatprep.subr.mxu0 0.0
  %500 = vmatpush1.msra.mxu0 0.0
  %501 = vmatprep.subr.mxu0 0.0
  %502 = vmatpush1.msra.mxu0 0.0
  %503 = vmatprep.subr.mxu0 0.0
  %504 = vmatpush1.msra.mxu0 0.0
  %505 = vmatprep.subr.mxu0 0.0
  %506 = vmatpush1.msra.mxu0 0.0
  %507 = vmatprep.subr.mxu0 0.0
  %508 = vmatpush1.msra.mxu0 0.0
  %509 = vmatprep.subr.mxu0 0.0
  %510 = vmatpush1.msra.mxu0 0.0
  %511 = vmatprep.subr.mxu0 0.0
  %512 = vmatpush1.msra.mxu0 0.0
  %513 = vmatprep.subr.mxu0 0.0
  %514 = vmatpush1.msra.mxu0 0.0
  %515 = vmatprep.subr.mxu0 0.0
  %516 = vmatpush1.msra.mxu0 0.0
  %517 = vmatprep.subr.mxu0 0.0
  %518 = vmatpush1.msra.mxu0 0.0
  %519 = vmatprep.mubr.f32.mxu0 0.0
  %520 = vmatmul.mubr.f32.gmra.mrb[0].mxu0 %v177
  %v521 = vpop.f32.mrb[0].mxu0
  %v522 = vadd.f32 %v433, %v521
  %v523 = vpop.f32.mrb[0].mxu0
  %v524 = vadd.f32 %v435, %v523
  %525 = vmatprep.mubr.f32.mxu0 0.0
  %526 = vmatmul.mubr.f32.gmra.mrb[0].mxu0 %v180
  %v527 = vpop.f32.mrb[0].mxu0
  %v528 = vadd.f32 %v439, %v527
  %v529 = vpop.f32.mrb[0].mxu0
  %v530 = vadd.f32 %v441, %v529
  %531 = vmatprep.mubr.f32.mxu0 0.0
  %532 = vmatmul.mubr.f32.gmra.mrb[0].mxu0 %v183
  %v533 = vpop.f32.mrb[0].mxu0
  %v534 = vadd.f32 %v445, %v533
  %v535 = vpop.f32.mrb[0].mxu0
  %v536 = vadd.f32 %v447, %v535
  %537 = vmatprep.mubr.f32.mxu0 0.0
  %538 = vmatmul.mubr.f32.gmra.mrb[0].mxu0 %v186
  %v539 = vpop.f32.mrb[0].mxu0
  %v540 = vadd.f32 %v451, %v539
  %v541 = vpop.f32.mrb[0].mxu0
  %v542 = vadd.f32 %v453, %v541
  %543 = vdwg.mxu0
  %544 = vst [vmem:[%s2] sm:$0xff] %v344
  %545 = vst [vmem:[%s2 + $0x8] sm:$0xff] %v346
  %546 = vst [vmem:[%s2 + $0x10] sm:$0xff] %v522
  %547 = vst [vmem:[%s2 + $0x18] sm:$0xff] %v524
  %548 = vst [vmem:[%s2 + $0x20] sm:$0xff] %v350
  %549 = vst [vmem:[%s2 + $0x28] sm:$0xff] %v352
  %550 = vst [vmem:[%s2 + $0x30] sm:$0xff] %v528
  %551 = vst [vmem:[%s2 + $0x38] sm:$0xff] %v530
  %552 = vst [vmem:[%s2 + $0x40] sm:$0xff] %v356
  %553 = vst [vmem:[%s2 + $0x48] sm:$0xff] %v358
  %554 = vst [vmem:[%s2 + $0x50] sm:$0xff] %v534
  %555 = vst [vmem:[%s2 + $0x58] sm:$0xff] %v536
  %556 = vst [vmem:[%s2 + $0x60] sm:$0xff] %v362
  %557 = vst [vmem:[%s2 + $0x68] sm:$0xff] %v364
  %558 = vst [vmem:[%s2 + $0x70] sm:$0xff] %v540
  %559 = vst [vmem:[%s2 + $0x78] sm:$0xff] %v542
  // Predicated region
  $region10: #{conv2d_3x3_same.1} parent=0 // pred_check
    _
  $region11: #{conv2d_3x3_same.1} parent=0 // pred_check_branch
    %561 = sbr.rel (0) target = $region13
  $region12: #{conv2d_3x3_same.1} parent=0 // pred_region
    _
  $region13: #{conv2d_3x3_same.1} parent=0 // pred_fallthru
    _
  // Predicated region
  $region14: #{conv2d_3x3_same.1} parent=0 // pred_check
    _
  $region15: #{conv2d_3x3_same.1} parent=0 // pred_check_branch
    %563 = sbr.rel (0) target = $region17
  $region16: #{conv2d_3x3_same.1} parent=0 // pred_region
    _
  $region17: #{conv2d_3x3_same.1} parent=0 // pred_fallthru
    _

</llo_original>
